<compile_context>
chip_gen: v7x
topology: tpu7x:2x2x1
jax: 0.10.0
libtpu: 0.0.40
codegen_flags: <defaults>
</compile_context>

<pallas_src>
import functools

import jax
import jax.numpy as jnp
from jax.experimental import pallas as pl
from jax.experimental.pallas import tpu as pltpu


def _causal_conv1d_kernel(x_ref, halo_ref, w_ref, b_ref, out_ref,
                          *, kernel_size, tn, cn):
    """One (batch, time-tile) grid step (any stride is handled by the wrapper).

    x_ref:    (C, tn)     current input time tile
    halo_ref: (C, 128)    the 128 input columns preceding this tile
    w_ref:    (K, H, C)   per-tap weights (VMEM resident)
    b_ref:    (H, 1)      bias, f32 (VMEM resident)
    out_ref:  (H, tn)     lane-dense output tile
    """
    K = kernel_size
    pad = K - 1
    H = out_ref.shape[0]
    j = pl.program_id(1)

    if pad > 0:
        # Causal left context = last `pad` columns of the 128-column block of x
        # that ends where this tile starts; zeros at the start of the sequence.
        # Replaces F.pad(x, (K-1, 0)) with no carried state, so both grid axes
        # stay parallel.
        h = halo_ref[:, 128 - pad:]
        left = jnp.where(j == 0, jnp.zeros_like(h), h)

    def shifted(c, k):
        # Input columns feeding output columns [c*cn, (c+1)*cn) at tap k.
        ofs = c * cn + k - pad                     # static Python int
        if ofs >= 0:
            return x_ref[:, ofs:ofs + cn]
        d = -ofs                                   # 0 < d <= pad, chunk 0 only
        return jnp.concatenate([left[:, pad - d:], x_ref[:, :cn - d]], axis=1)

    bias = jnp.broadcast_to(b_ref[...], (H, cn))   # hoisted out of the loops

    for c in range(tn // cn):                      # static unroll over chunks
        # Tap K-1 is the lane-aligned one; it initialises the accumulator.
        acc = jnp.dot(w_ref[K - 1], shifted(c, K - 1),
                      preferred_element_type=jnp.float32)
        for k in range(K - 1):
            acc += jnp.dot(w_ref[k], shifted(c, k),
                           preferred_element_type=jnp.float32)
        out_ref[:, c * cn:(c + 1) * cn] = (acc + bias).astype(out_ref.dtype)


@functools.partial(
    jax.jit,
    static_argnames=("kernel_size", "stride", "time_tile", "chunk",
                     "compute_dtype", "out_dtype"))
def conv1d_forward(x, weight, bias, *, kernel_size, stride=1,
                   time_tile=4096, chunk=512,
                   compute_dtype=None, out_dtype=None):
    """Exact forward semantics of the PyTorch Conv1d module.

    Args:
      x:      (B, C_in, L) input.
      weight: (H, C_in * K) nn.Linear weight (columns ordered c*K + k).
      bias:   (H,) nn.Linear bias.
      compute_dtype: optional (e.g. jnp.bfloat16) matmul input dtype (v6e/v7x);
        accumulation and epilogue stay f32.
      out_dtype: optional output dtype (e.g. jnp.bfloat16 to halve the dominant
        HBM write stream); defaults to x's dtype.

    Returns:
      (B, H, ceil(L / stride)) array.
    """
    B, C, L = x.shape
    K = kernel_size
    H, CK = weight.shape
    assert CK == C * K, (CK, C, K)
    n_out = -(-L // stride)                 # the PyTorch loop never breaks
    if out_dtype is None:
        out_dtype = x.dtype

    if stride > 1:
        # Apply the stride (and the causal left pad) at data-movement time:
        # one small XLA pass over the *input* stream (C*K rows; input bytes are
        # ~1/8 of the output bytes at H/C = 8), after which the kernel runs as
        # a kernel_size=1 conv -> a single (H, C*K) @ (C*K, cn) matmul per
        # chunk, with no strided lane slices in the hot loop.
        x_pad = jnp.pad(x, ((0, 0), (0, 0), (K - 1, 0)))
        taps = [x_pad[:, :, k:k + (n_out - 1) * stride + 1:stride]
                for k in range(K)]
        x = jnp.stack(taps, axis=2).reshape(B, C * K, n_out)  # rows: c*K + k
        C, K = C * K, 1
        B, C, L = x.shape                   # now L == n_out, stride folded in

    pad = K - 1
    assert pad < 128, "kernel_size must be < 129 for the 128-column halo"

    if compute_dtype is not None:           # bf16 inputs halve x/w HBM bytes
        x = x.astype(compute_dtype)
        weight = weight.astype(compute_dtype)
    bias_f32 = bias.astype(jnp.float32).reshape(H, 1)

    # (H, C*K) with column order c*K + k  ->  per-tap weights (K, H, C).
    w_kc = jnp.transpose(weight.reshape(H, C, K), (2, 0, 1))

    # --- time tiling -----------------------------------------------------
    # Big grid tiles amortise per-step overhead; the in-kernel chunk loop keeps
    # the f32 accumulator small.  Even at tn=4096 the double-buffered blocks
    # are ~1 MiB, far under VMEM on v5e/v6e (128 MiB) and v7x (64 MiB).
    n_out_pad = 128 * (-(-n_out // 128))
    tn = max(128, min((time_tile // 128) * 128, n_out_pad))   # grid time tile
    cn = max(128, min((chunk // 128) * 128, tn))              # in-kernel chunk
    tn = cn * (-(-tn // cn))                                  # tn % cn == 0
    n_tiles = -(-n_out // tn)
    bpt = tn // 128                       # 128-column halo blocks per tile

    kernel = functools.partial(_causal_conv1d_kernel,
                               kernel_size=K, tn=tn, cn=cn)

    cost = pl.CostEstimate(
        flops=2 * B * n_out * H * C * K,
        transcendentals=0,
        bytes_accessed=(x.size * x.dtype.itemsize
                        + w_kc.size * w_kc.dtype.itemsize + H * 4
                        + B * H * n_out * jnp.dtype(out_dtype).itemsize))

    return pl.pallas_call(
        kernel,
        out_shape=jax.ShapeDtypeStruct((B, H, n_out), out_dtype),
        grid=(B, n_tiles),
        in_specs=[
            # x main tile: single HBM pass over the input.
            pl.BlockSpec((None, C, tn), lambda b, j: (b, 0, j)),
            # 128-column halo ending where this tile starts (causal left
            # context); clamped at j == 0 where the kernel substitutes zeros.
            pl.BlockSpec((None, C, 128),
                         lambda b, j: (b, 0, jnp.maximum(j * bpt - 1, 0))),
            # weights / bias: constant index map -> stay resident in VMEM.
            pl.BlockSpec((K, H, C), lambda b, j: (0, 0, 0)),
            pl.BlockSpec((H, 1), lambda b, j: (0, 0)),
        ],
        # Lane-dense (H, tn) tile written directly into (B, H, n_out).
        out_specs=pl.BlockSpec((None, H, tn), lambda b, j: (b, 0, j)),
        compiler_params=pltpu.CompilerParams(
            # No cross-step state -> both axes parallel (v7x megacore can
            # shard batch and time).
            dimension_semantics=("parallel", "parallel")),
        cost_estimate=cost,
    )(x, x, w_kc, bias_f32)


def _reference_forward(x, weight, bias, kernel_size, stride=1):
    """Pure-jnp transliteration of the PyTorch forward loop."""
    B, C, L = x.shape
    pad = kernel_size - 1
    x_pad = jnp.pad(x, ((0, 0), (0, 0), (pad, 0)))
    outs = []
    for i in range(0, L, stride):
        if i + kernel_size > x_pad.shape[2]:
            break
        chunk = x_pad[:, :, i:i + kernel_size].reshape(B, -1)
        outs.append(chunk @ weight.T + bias)
    return jnp.stack(outs, axis=2)


if __name__ == "__main__":
    # Module hyper-parameters (TimeSeries net style).
    input_size = 4      # C_in
    hidden_size = 32    # H
    kernel_size = 3     # K

    key = jax.random.PRNGKey(0)
    k_x, k_w, k_b, k_x2, k_x3, k_x4 = jax.random.split(key, 6)

    # Deterministic nn.Linear(input_size*kernel_size, hidden_size)-style init.
    fan_in = input_size * kernel_size
    bound = 1.0 / (fan_in ** 0.5)
    weight = jax.random.uniform(
        k_w, (hidden_size, fan_in), jnp.float32, -bound, bound)
    bias = jax.random.uniform(
        k_b, (hidden_size,), jnp.float32, -bound, bound)

    def check(out, ref, atol, rtol, name):
        assert out.shape == ref.shape, (name, out.shape, ref.shape)
        out32 = out.astype(jnp.float32)
        err = float(jnp.max(jnp.abs(out32 - ref)))
        assert jnp.allclose(out32, ref, atol=atol, rtol=rtol), (name, err)

    # 1) f32, single tile (B, C, L) = (2, 4, 16).
    B, L = 2, 16
    x = jax.random.normal(k_x, (B, input_size, L), jnp.float32)
    out = jax.block_until_ready(
        conv1d_forward(x, weight, bias, kernel_size=kernel_size))
    ref = _reference_forward(x, weight, bias, kernel_size)
    check(out, ref, 1e-4, 1e-4, "base")

    # 2) multi-tile halo path + ragged last tile.
    L2 = 200
    x2 = jax.random.normal(k_x2, (B, input_size, L2), jnp.float32)
    out2 = jax.block_until_ready(
        conv1d_forward(x2, weight, bias, kernel_size=kernel_size,
                       time_tile=128))
    ref2 = _reference_forward(x2, weight, bias, kernel_size)
    check(out2, ref2, 1e-4, 1e-4, "halo")

    # 3) multi-tile + multi-chunk accumulator path.
    L3 = 320
    x3 = jax.random.normal(k_x3, (B, input_size, L3), jnp.float32)
    out3 = jax.block_until_ready(
        conv1d_forward(x3, weight, bias, kernel_size=kernel_size,
                       time_tile=256, chunk=128))
    ref3 = _reference_forward(x3, weight, bias, kernel_size)
    check(out3, ref3, 1e-4, 1e-4, "chunks")

    # 4) stride > 1 (wrapper-side strided gather, kernel_size=1 fast path).
    L4, stride = 200, 2
    x4 = jax.random.normal(k_x4, (B, input_size, L4), jnp.float32)
    out4 = jax.block_until_ready(
        conv1d_forward(x4, weight, bias, kernel_size=kernel_size,
                       stride=stride))
    ref4 = _reference_forward(x4, weight, bias, kernel_size, stride)
    check(out4, ref4, 1e-4, 1e-4, "stride2")

    # 5) bf16 output (halves the dominant HBM write stream on v5e/v6e).
    out5 = jax.block_until_ready(
        conv1d_forward(x, weight, bias, kernel_size=kernel_size,
                       out_dtype=jnp.bfloat16))
    check(out5, ref, 5e-2, 5e-2, "bf16_out")

    # 6) bf16 compute path (v6e/v7x; f32 accumulation and epilogue).
    out6 = jax.block_until_ready(
        conv1d_forward(x, weight, bias, kernel_size=kernel_size,
                       compute_dtype=jnp.bfloat16))
    check(out6, ref, 5e-2, 5e-2, "bf16_compute")

    print("KERNEL_OK")
</pallas_src>

<mosaic_0001>
module attributes {stable_mosaic.version = 11 : i64} {
  func.func @_causal_conv1d_kernel(%arg0: i32, %arg1: i32, %arg2: memref<1x4x128xf32, #tpu.memory_space<vmem>>, %arg3: memref<1x4x128xf32, #tpu.memory_space<vmem>>, %arg4: memref<3x32x4xf32, #tpu.memory_space<vmem>>, %arg5: memref<32x1xf32, #tpu.memory_space<vmem>>, %arg6: memref<1x32x128xf32, #tpu.memory_space<vmem>>) attributes {dimension_semantics = [#tpu.dimension_semantics<parallel>, #tpu.dimension_semantics<parallel>], iteration_bounds = array<i64: 2, 1>, scalar_prefetch = 0 : i64, scratch_operands = 0 : i64, tpu.core_type = #tpu.core_type<tc>, window_params = [{transform_indices = @transform_0, window_bounds = array<i64: 1, 4, 128>}, {transform_indices = @transform_1, window_bounds = array<i64: 1, 4, 128>}, {pipeline_mode = #tpu.pipeline_mode<synchronous>, transform_indices = @transform_2, window_bounds = array<i64: 3, 32, 4>}, {pipeline_mode = #tpu.pipeline_mode<synchronous>, transform_indices = @transform_3, window_bounds = array<i64: 32, 1>}, {transform_indices = @transform_4, window_bounds = array<i64: 1, 32, 128>}]} {
    %c0 = arith.constant 0 : index
    %c0_0 = arith.constant 0 : index
    %c126 = arith.constant 126 : index
    %0 = vector.load %arg3[%c0, %c0_0, %c126] : memref<1x4x128xf32, #tpu.memory_space<vmem>>, vector<1x4x2xf32>
    %1 = vector.shape_cast %0 : vector<1x4x2xf32> to vector<4x2xf32>
    %c0_i32 = arith.constant 0 : i32
    %2 = arith.cmpi eq, %arg1, %c0_i32 : i32
    %cst = arith.constant 0.000000e+00 : f32
    %3 = vector.broadcast %cst : f32 to vector<4x2xf32>
    %4 = arith.select %2, %3, %1 : vector<4x2xf32>
    %c0_1 = arith.constant 0 : index
    %c0_2 = arith.constant 0 : index
    %5 = vector.load %arg5[%c0_1, %c0_2] : memref<32x1xf32, #tpu.memory_space<vmem>>, vector<32x1xf32>
    %6 = vector.shape_cast %5 : vector<32x1xf32> to vector<32x1xf32>
    %7 = vector.broadcast %6 : vector<32x1xf32> to vector<32x128xf32>
    %c2 = arith.constant 2 : index
    %c0_3 = arith.constant 0 : index
    %c0_4 = arith.constant 0 : index
    %8 = vector.load %arg4[%c2, %c0_3, %c0_4] : memref<3x32x4xf32, #tpu.memory_space<vmem>>, vector<1x32x4xf32>
    %9 = vector.shape_cast %8 : vector<1x32x4xf32> to vector<32x4xf32>
    %c0_5 = arith.constant 0 : index
    %c0_6 = arith.constant 0 : index
    %c0_7 = arith.constant 0 : index
    %10 = vector.load %arg2[%c0_5, %c0_6, %c0_7] : memref<1x4x128xf32, #tpu.memory_space<vmem>>, vector<1x4x128xf32>
    %11 = vector.shape_cast %10 : vector<1x4x128xf32> to vector<4x128xf32>
    %cst_8 = arith.constant dense<0.000000e+00> : vector<32x128xf32>
    %12 = tpu.matmul %9, %11, %cst_8 {dimension_numbers = #tpu.dot_dimension_numbers<[1], [0], [0], [1], [0, 0, 1, 1], [], []>} : vector<32x4xf32>, vector<4x128xf32>, vector<32x128xf32> -> vector<32x128xf32>
    %c0_9 = arith.constant 0 : index
    %c0_10 = arith.constant 0 : index
    %c0_11 = arith.constant 0 : index
    %13 = vector.load %arg4[%c0_9, %c0_10, %c0_11] : memref<3x32x4xf32, #tpu.memory_space<vmem>>, vector<1x32x4xf32>
    %14 = vector.shape_cast %13 : vector<1x32x4xf32> to vector<32x4xf32>
    %c0_12 = arith.constant 0 : index
    %c0_13 = arith.constant 0 : index
    %c0_14 = arith.constant 0 : index
    %15 = vector.load %arg2[%c0_12, %c0_13, %c0_14] : memref<1x4x128xf32, #tpu.memory_space<vmem>>, vector<1x4x126xf32>
    %16 = vector.shape_cast %15 : vector<1x4x126xf32> to vector<4x126xf32>
    %17 = tpu.concatenate %4, %16 in 1 : vector<4x2xf32>, vector<4x126xf32> -> vector<4x128xf32>
    %cst_15 = arith.constant dense<0.000000e+00> : vector<32x128xf32>
    %18 = tpu.matmul %14, %17, %cst_15 {dimension_numbers = #tpu.dot_dimension_numbers<[1], [0], [0], [1], [0, 0, 1, 1], [], []>} : vector<32x4xf32>, vector<4x128xf32>, vector<32x128xf32> -> vector<32x128xf32>
    %19 = arith.addf %12, %18 : vector<32x128xf32>
    %c1 = arith.constant 1 : index
    %c0_16 = arith.constant 0 : index
    %c0_17 = arith.constant 0 : index
    %20 = vector.load %arg4[%c1, %c0_16, %c0_17] : memref<3x32x4xf32, #tpu.memory_space<vmem>>, vector<1x32x4xf32>
    %21 = vector.shape_cast %20 : vector<1x32x4xf32> to vector<32x4xf32>
    %22 = vector.extract_strided_slice %4 {offsets = [0, 1], sizes = [4, 1], strides = [1, 1]} : vector<4x2xf32> to vector<4x1xf32>
    %c0_18 = arith.constant 0 : index
    %c0_19 = arith.constant 0 : index
    %c0_20 = arith.constant 0 : index
    %23 = vector.load %arg2[%c0_18, %c0_19, %c0_20] : memref<1x4x128xf32, #tpu.memory_space<vmem>>, vector<1x4x127xf32>
    %24 = vector.shape_cast %23 : vector<1x4x127xf32> to vector<4x127xf32>
    %25 = tpu.concatenate %22, %24 in 1 : vector<4x1xf32>, vector<4x127xf32> -> vector<4x128xf32>
    %cst_21 = arith.constant dense<0.000000e+00> : vector<32x128xf32>
    %26 = tpu.matmul %21, %25, %cst_21 {dimension_numbers = #tpu.dot_dimension_numbers<[1], [0], [0], [1], [0, 0, 1, 1], [], []>} : vector<32x4xf32>, vector<4x128xf32>, vector<32x128xf32> -> vector<32x128xf32>
    %27 = arith.addf %19, %26 : vector<32x128xf32>
    %28 = arith.addf %27, %7 : vector<32x128xf32>
    %c0_22 = arith.constant 0 : index
    %c0_23 = arith.constant 0 : index
    %c0_24 = arith.constant 0 : index
    %29 = vector.load %arg6[%c0_22, %c0_23, %c0_24] : memref<1x32x128xf32, #tpu.memory_space<vmem>>, vector<1x32x128xf32>
    %30 = vector.shape_cast %29 : vector<1x32x128xf32> to vector<32x128xf32>
    %31 = vector.shape_cast %28 : vector<32x128xf32> to vector<1x32x128xf32>
    tpu.vector_store %arg6[%c0_22, %c0_23, %c0_24], %31 {strides = array<i32>} : memref<1x32x128xf32, #tpu.memory_space<vmem>>, vector<1x32x128xf32>,
    return
  }
  func.func @transform_0(%arg0: i32, %arg1: i32) -> (i32, i32, i32) {
    %c0_i32 = arith.constant 0 : i32
    %c0_i32_0 = arith.constant 0 : i32
    return %arg0, %c0_i32, %arg1 : i32, i32, i32
  }
  func.func @transform_1(%arg0: i32, %arg1: i32) -> (i32, i32, i32) {
    %c1_i32 = arith.constant 1 : i32
    %0 = arith.muli %arg1, %c1_i32 : i32
    %c1_i32_0 = arith.constant 1 : i32
    %1 = arith.subi %0, %c1_i32_0 : i32
    %c0_i32 = arith.constant 0 : i32
    %2 = arith.maxsi %1, %c0_i32 : i32
    %c0_i32_1 = arith.constant 0 : i32
    %c0_i32_2 = arith.constant 0 : i32
    return %arg0, %c0_i32_1, %2 : i32, i32, i32
  }
  func.func @transform_2(%arg0: i32, %arg1: i32) -> (i32, i32, i32) {
    %c0_i32 = arith.constant 0 : i32
    %c0_i32_0 = arith.constant 0 : i32
    %c0_i32_1 = arith.constant 0 : i32
    %c0_i32_2 = arith.constant 0 : i32
    return %c0_i32, %c0_i32_0, %c0_i32_1 : i32, i32, i32
  }
  func.func @transform_3(%arg0: i32, %arg1: i32) -> (i32, i32) {
    %c0_i32 = arith.constant 0 : i32
    %c0_i32_0 = arith.constant 0 : i32
    %c0_i32_1 = arith.constant 0 : i32
    return %c0_i32, %c0_i32_0 : i32, i32
  }
  func.func @transform_4(%arg0: i32, %arg1: i32) -> (i32, i32, i32) {
    %c0_i32 = arith.constant 0 : i32
    %c0_i32_0 = arith.constant 0 : i32
    return %arg0, %c0_i32, %arg1 : i32, i32, i32
  }
}

</mosaic_0001>

<llo_original>
// kernel: conv1d_forward.1
$region0: #{conv1d_forward.1}
  #allocation0 [shape = 'u32[]', space=smem, size = 0x4, offset = 0x4, fixed_abs, tag = 'smem constant byte address 0x4 - core index']
  #allocation1 [shape = 'u32[144,128]{1,0:T(1,128)}', space=vmem, size = 0x12000, scoped, tag = 'internal scratch']
  %s0 = inlined_call_operand.vmem [shape: f32[2,4,16], index: 0, kind: input, shape index: {}, may-alias: {0,1}]
  %s1 = inlined_call_operand.vmem [shape: f32[2,4,16], index: 1, kind: input, shape index: {}, may-alias: {0,1}]
  %s2 = inlined_call_operand.vmem [shape: f32[3,32,4], index: 2, kind: input, shape index: {}]
  %s3 = inlined_call_operand.vmem [shape: f32[32,1], index: 3, kind: input, shape index: {}]
  %s4 = inlined_call_operand.vmem [shape: f32[2,32,16], index: 4, kind: output, shape index: {}]
  %s5 = sld [smem:[#allocation0]]
  $region49: #{conv1d_forward.1} parent=0
    _
  %s7 = ssub.s32 1, %s5
  %s8 = scalar_select 0, %s7, %s5
  loop: start=0, step=1, limit=4
  $region2: #{conv1d_forward.1} parent=0 // loop_pre_header
    _
  $region3: #{conv1d_forward.1} parent=0 // loop_header
    %s10 = sphi 0, %s14
    %p11 = scmp.ge.s32.totalorder %s10, 4
    %s17 = sphi 0, %s29
    %s18 = sphi 0, %s25
    %s19 = sphi 0, %s17
    %s20 = sphi 0, %s18
    %s21 = sphi 0, %s19
    %s22 = sphi 0, %s20
    %s34 = sphi 0, %s36
    %s37 = sphi 0, %s34
    %s38 = sphi 0, %s37
    %s54 = sphi 0, %s38
    %s68 = sphi 0, %s70
    %s71 = sphi 0, %s68
    %s72 = sphi 0, %s71
    %s88 = sphi 0, %s72
    %s92 = sphi 0, %s92
    %s94 = sphi 0, %s92
    %s95 = sphi 0, %s94
    %s109 = sphi 0, %s95
    %s113 = sphi 0, %s113
    %s115 = sphi 0, %s113
    %s116 = sphi 0, %s115
    %s130 = sphi 0, %s116
    %s138 = sphi 0, %s140
    %s141 = sphi 0, %s138
    %s142 = sphi 0, %s141
    %s158 = sphi 0, %s142
  $region4: #{conv1d_forward.1} parent=0 // loop_header_branch
    %13 = sbr.rel (%p11) target = $region8
  $region5: #{conv1d_forward.1} parent=0 // loop_body
    %s15 = ssub.s32 %s10, 1
    %s16 = ssub.s32 %s10, 2
    %s23 = sadd.s32 1, %s18
    %p24 = scmp.ge.s32.totalorder %s23, 1
    %s25 = scalar_select %p24, 0, %s23
    %s26 = sadd.s32 1, %s17
    %s27 = scalar_select %p24, %s26, %s17
    %p28 = scmp.ge.s32.totalorder %s27, 2
    %s29 = scalar_select %p28, 0, %s27
    %s30 = ssub.s32 %s17, %s29
    %s31 = ssub.s32 %s18, %s25
    %s32 = sor.u32 %s30, %s31
    %p33 = scmp.eq.s32.totalorder %s32, 0
    %s35 = sadd.s32 %s34, 1
    %s36 = scalar_select %p33, %s34, %s35
    %p39 = pneg %p33
    %p40 = scmp.eq.s32.totalorder %s10, 1
    %p41 = por %p39, %p40
    %p42 = scmp.ne.s32.totalorder %s34, %s37
    %p43 = scmp.eq.s32.totalorder %s10, 0
    %p44 = por %p42, %p43
    %p45 = scmp.ne.s32.totalorder %s34, %s37
    %p46 = scmp.eq.s32.totalorder %s15, 1
    %p47 = por %p45, %p46
    %p48 = scmp.ne.s32.totalorder %s37, %s38
    %p49 = scmp.eq.s32.totalorder %s15, 0
    %p50 = por %p48, %p49
    %p51 = scmp.ne.s32.totalorder %s37, %s38
    %p52 = scmp.eq.s32.totalorder %s16, 1
    %p53 = por %p51, %p52
    %p55 = scmp.ne.s32.totalorder %s38, %s54
    %p56 = scmp.eq.s32.totalorder %s16, 0
    %p57 = por %p55, %p56
    %s58 = ssub.s32 %s18, 1
    %p59 = scmp.gt.s32.totalorder %s58, 0
    %s60 = scalar_select %p59, %s58, 0
    %s61 = ssub.s32 %s25, 1
    %p62 = scmp.gt.s32.totalorder %s61, 0
    %s63 = scalar_select %p62, %s61, 0
    %s64 = ssub.s32 %s17, %s29
    %s65 = ssub.s32 %s60, %s63
    %s66 = sor.u32 %s64, %s65
    %p67 = scmp.eq.s32.totalorder %s66, 0
    %s69 = sadd.s32 %s68, 1
    %s70 = scalar_select %p67, %s68, %s69
    %p73 = pneg %p67
    %p74 = scmp.eq.s32.totalorder %s10, 1
    %p75 = por %p73, %p74
    %p76 = scmp.ne.s32.totalorder %s68, %s71
    %p77 = scmp.eq.s32.totalorder %s10, 0
    %p78 = por %p76, %p77
    %p79 = scmp.ne.s32.totalorder %s68, %s71
    %p80 = scmp.eq.s32.totalorder %s15, 1
    %p81 = por %p79, %p80
    %p82 = scmp.ne.s32.totalorder %s71, %s72
    %p83 = scmp.eq.s32.totalorder %s15, 0
    %p84 = por %p82, %p83
    %p85 = scmp.ne.s32.totalorder %s71, %s72
    %p86 = scmp.eq.s32.totalorder %s16, 1
    %p87 = por %p85, %p86
    %p89 = scmp.ne.s32.totalorder %s72, %s88
    %p90 = scmp.eq.s32.totalorder %s16, 0
    %p91 = por %p89, %p90
    %s93 = sadd.s32 %s92, 1
    %p96 = scmp.eq.s32.totalorder %s10, 1
    %p97 = scmp.ne.s32.totalorder %s92, %s94
    %p98 = scmp.eq.s32.totalorder %s10, 0
    %p99 = por %p97, %p98
    %p100 = scmp.ne.s32.totalorder %s92, %s94
    %p101 = scmp.eq.s32.totalorder %s15, 1
    %p102 = por %p100, %p101
    %p103 = scmp.ne.s32.totalorder %s94, %s95
    %p104 = scmp.eq.s32.totalorder %s15, 0
    %p105 = por %p103, %p104
    %p106 = scmp.ne.s32.totalorder %s94, %s95
    %p107 = scmp.eq.s32.totalorder %s16, 1
    %p108 = por %p106, %p107
    %p110 = scmp.ne.s32.totalorder %s95, %s109
    %p111 = scmp.eq.s32.totalorder %s16, 0
    %p112 = por %p110, %p111
    %s114 = sadd.s32 %s113, 1
    %p117 = scmp.eq.s32.totalorder %s10, 1
    %p118 = scmp.ne.s32.totalorder %s113, %s115
    %p119 = scmp.eq.s32.totalorder %s10, 0
    %p120 = por %p118, %p119
    %p121 = scmp.ne.s32.totalorder %s113, %s115
    %p122 = scmp.eq.s32.totalorder %s15, 1
    %p123 = por %p121, %p122
    %p124 = scmp.ne.s32.totalorder %s115, %s116
    %p125 = scmp.eq.s32.totalorder %s15, 0
    %p126 = por %p124, %p125
    %p127 = scmp.ne.s32.totalorder %s115, %s116
    %p128 = scmp.eq.s32.totalorder %s16, 1
    %p129 = por %p127, %p128
    %p131 = scmp.ne.s32.totalorder %s116, %s130
    %p132 = scmp.eq.s32.totalorder %s16, 0
    %p133 = por %p131, %p132
    %s134 = ssub.s32 %s17, %s29
    %s135 = ssub.s32 %s18, %s25
    %s136 = sor.u32 %s134, %s135
    %p137 = scmp.eq.s32.totalorder %s136, 0
    %s139 = sadd.s32 %s138, 1
    %s140 = scalar_select %p137, %s138, %s139
    %p143 = pneg %p137
    %p144 = scmp.eq.s32.totalorder %s10, 1
    %p145 = por %p143, %p144
    %p146 = scmp.ne.s32.totalorder %s138, %s141
    %p147 = scmp.eq.s32.totalorder %s10, 0
    %p148 = por %p146, %p147
    %p149 = scmp.ne.s32.totalorder %s138, %s141
    %p150 = scmp.eq.s32.totalorder %s15, 1
    %p151 = por %p149, %p150
    %p152 = scmp.ne.s32.totalorder %s141, %s142
    %p153 = scmp.eq.s32.totalorder %s15, 0
    %p154 = por %p152, %p153
    %p155 = scmp.ne.s32.totalorder %s141, %s142
    %p156 = scmp.eq.s32.totalorder %s16, 1
    %p157 = por %p155, %p156
    %p159 = scmp.ne.s32.totalorder %s142, %s158
    %p160 = scmp.eq.s32.totalorder %s16, 0
    %p161 = por %p159, %p160
    %p162 = scmp.le.s32.totalorder 1, %s10
    %p163 = scmp.lt.s32.totalorder %s10, 3
    %p164 = pnand %p162, %p163
    %p165 = pneg %p164
    // Predicated region
    $region9: #{conv1d_forward.1} parent=5 // pred_check
      _
    $region10: #{conv1d_forward.1} parent=5 // pred_check_branch
      %167 = sbr.rel (%p164) target = $region12
    $region11: #{conv1d_forward.1} parent=5 // pred_region
      %s168 = ssub.s32 %s10, 1
      // Predicated region
      $region13: #{conv1d_forward.1} parent=11 // pred_check
        %p169 = pneg %p105
      $region14: #{conv1d_forward.1} parent=11 // pred_check_branch
        %171 = sbr.rel (%p169) target = $region16
      $region15: #{conv1d_forward.1} parent=11 // pred_region
        _
      $region16: #{conv1d_forward.1} parent=11 // pred_fallthru
        _
      // Predicated region
      $region17: #{conv1d_forward.1} parent=11 // pred_check
        %p172 = pneg %p126
      $region18: #{conv1d_forward.1} parent=11 // pred_check_branch
        %174 = sbr.rel (%p172) target = $region20
      $region19: #{conv1d_forward.1} parent=11 // pred_region
        _
      $region20: #{conv1d_forward.1} parent=11 // pred_fallthru
        _
    $region12: #{conv1d_forward.1} parent=5 // pred_fallthru
      _
    %p175 = scmp.lt.s32.totalorder %s10, 2
    // Predicated region
    $region21: #{conv1d_forward.1} parent=5 // pred_check
      %p176 = pneg %p175
    $region22: #{conv1d_forward.1} parent=5 // pred_check_branch
      %178 = sbr.rel (%p176) target = $region24
    $region23: #{conv1d_forward.1} parent=5 // pred_region
      // Predicated region
      $region25: #{conv1d_forward.1} parent=23 // pred_check
        %p179 = pneg %p44
      $region26: #{conv1d_forward.1} parent=23 // pred_check_branch
        %181 = sbr.rel (%p179) target = $region28
      $region27: #{conv1d_forward.1} parent=23 // pred_region
        %p182 = scmp.lt.s32.totalorder %s17, 1
        %s183 = scalar_select %p182, %s17, 1
        %p184 = scmp.lt.s32.totalorder %s18, 0
        %s185 = scalar_select %p184, %s18, 0
        %s186 = sadd.s32 %s185, %s183
        %s187 = smul.addr %s186, 4
        %s188 = scalar_lea.vmem %s0, %s187
      $region28: #{conv1d_forward.1} parent=23 // pred_fallthru
        _
      // Predicated region
      $region29: #{conv1d_forward.1} parent=23 // pred_check
        %p189 = pneg %p78
      $region30: #{conv1d_forward.1} parent=23 // pred_check_branch
        %191 = sbr.rel (%p189) target = $region32
      $region31: #{conv1d_forward.1} parent=23 // pred_region
        %s192 = ssub.s32 %s18, 1
        %p193 = scmp.gt.s32.totalorder %s192, 0
        %s194 = scalar_select %p193, %s192, 0
        %p195 = scmp.lt.s32.totalorder %s17, 1
        %s196 = scalar_select %p195, %s17, 1
        %p197 = scmp.lt.s32.totalorder %s194, 0
        %s198 = scalar_select %p197, %s194, 0
        %s199 = sadd.s32 %s198, %s196
        %s200 = smul.addr %s199, 4
        %s201 = scalar_lea.vmem %s1, %s200
        %s202 = ssub.s32 %s18, 1
        %p203 = scmp.gt.s32.totalorder %s202, 0
        %s204 = scalar_select %p203, %s202, 0
      $region32: #{conv1d_forward.1} parent=23 // pred_fallthru
        _
    $region24: #{conv1d_forward.1} parent=5 // pred_fallthru
      _
    %p205 = scmp.le.s32.totalorder 1, %s10
    %p206 = scmp.lt.s32.totalorder %s10, 3
    %p207 = pnand %p205, %p206
    %p208 = pneg %p207
    // Predicated region
    $region33: #{conv1d_forward.1} parent=5 // pred_check
      _
    $region34: #{conv1d_forward.1} parent=5 // pred_check_branch
      %210 = sbr.rel (%p207) target = $region36
    $region35: #{conv1d_forward.1} parent=5 // pred_region
      %s211 = ssub.s32 %s10, 1
      %p212 = scmp.lt.s32.totalorder %s19, 1
      %s213 = scalar_select %p212, %s19, 1
      %p214 = scmp.lt.s32.totalorder %s20, 0
      %s215 = scalar_select %p214, %s20, 0
      %s216 = sadd.s32 %s215, %s213
      %s217 = smul.addr %s216, 4
      %s218 = scalar_lea.vmem %s0, %s217
      %p219 = pneg %p50
      %p220 = pneg %p47
      %s221 = ssub.s32 %s20, 1
      %p222 = scmp.gt.s32.totalorder %s221, 0
      %s223 = scalar_select %p222, %s221, 0
      %p224 = scmp.lt.s32.totalorder %s19, 1
      %s225 = scalar_select %p224, %s19, 1
      %p226 = scmp.lt.s32.totalorder %s223, 0
      %s227 = scalar_select %p226, %s223, 0
      %s228 = sadd.s32 %s227, %s225
      %s229 = smul.addr %s228, 4
      %s230 = scalar_lea.vmem %s1, %s229
      %p231 = pneg %p84
      %p232 = pneg %p81
      %p233 = pneg %p105
      %p234 = pneg %p102
      %p235 = pneg %p126
      %p236 = pneg %p123
      %p237 = pneg %p154
      %p238 = pneg %p151
      %p239 = scmp.lt.s32.totalorder %s19, 1
      %s240 = scalar_select %p239, %s19, 1
      %p241 = scmp.lt.s32.totalorder %s20, 0
      %s242 = scalar_select %p241, %s20, 0
      %s243 = smul.addr %s240, 4
      %s244 = sadd.s32 %s242, %s243
      %s245 = smul.addr %s244, 8
      %s246 = scalar_lea.vmem %s4, %s245
      %p247 = scmp.lt.s32.totalorder %s19, 1
      %s248 = scalar_select %p247, %s19, 1
      %p249 = scmp.lt.s32.totalorder %s20, 0
      %s250 = scalar_select %p249, %s20, 0
      %s251 = sadd.s32 %s250, %s248
      %s252 = smul.addr %s251, 4
      %s253 = scalar_lea.vmem %s0, %s252
      %s254 = ssub.s32 %s20, 1
      %p255 = scmp.gt.s32.totalorder %s254, 0
      %s256 = scalar_select %p255, %s254, 0
      %p257 = scmp.lt.s32.totalorder %s19, 1
      %s258 = scalar_select %p257, %s19, 1
      %p259 = scmp.lt.s32.totalorder %s256, 0
      %s260 = scalar_select %p259, %s256, 0
      %s261 = sadd.s32 %s260, %s258
      %s262 = smul.addr %s261, 4
      %s263 = scalar_lea.vmem %s1, %s262
      %s264 = ssub.s32 %s20, 1
      %p265 = scmp.gt.s32.totalorder %s264, 0
      %s266 = scalar_select %p265, %s264, 0
      %p267 = scmp.lt.s32.totalorder %s19, 1
      %s268 = scalar_select %p267, %s19, 1
      %p269 = scmp.lt.s32.totalorder %s20, 0
      %s270 = scalar_select %p269, %s20, 0
      %s271 = smul.addr %s268, 4
      %s272 = sadd.s32 %s270, %s271
      %s273 = smul.addr %s272, 8
      %s274 = scalar_lea.vmem %s4, %s273
      %v275 = vld [vmem:[%s263] sm:$0xf]
      %p276 = scmp.eq.s32.totalorder %s20, 0
      %s277 = scalar_select %p276, 1, 0
      %v278 = vstv %s277
      %vm279 = vcmp.eq.s32.totalorder %v278, 1
      %v280 = vsel %vm279, 0.0, %v275
      %v281 = vld [vmem:[%s3] sm:$0xff]
      %v282 = vld [vmem:[%s3 + $0x8] sm:$0xff]
      %v283 = vld [vmem:[%s3 + $0x10] sm:$0xff]
      %v284 = vld [vmem:[%s3 + $0x18] sm:$0xff]
      %286 = vset.pattern.permute.xlu0 0
      %287 = vperm.xlu0 %286, %v281
      %v288 = vpop.permute.xlu0 %287
      %291 = vset.pattern.permute.xlu0 0
      %292 = vperm.xlu0 %291, %v282
      %v293 = vpop.permute.xlu0 %292
      %296 = vset.pattern.permute.xlu0 0
      %297 = vperm.xlu0 %296, %v283
      %v298 = vpop.permute.xlu0 %297
      %301 = vset.pattern.permute.xlu0 0
      %302 = vperm.xlu0 %301, %v284
      %v303 = vpop.permute.xlu0 %302
      %s305 = scalar_lea.vmem %s2, 64
      %v306 = vld [vmem:[%s305] sm:$0xff]
      %v307 = vld [vmem:[%s305 + $0x8] sm:$0xff]
      %v308 = vld [vmem:[%s305 + $0x10] sm:$0xff]
      %v309 = vld [vmem:[%s305 + $0x18] sm:$0xff]
      %v310 = vld [vmem:[%s253] sm:$0xf]
      %v311 = vld [vmem:[%s2] sm:$0xff]
      %v312 = vld [vmem:[%s2 + $0x8] sm:$0xff]
      %v313 = vld [vmem:[%s2 + $0x10] sm:$0xff]
      %v314 = vld [vmem:[%s2 + $0x18] sm:$0xff]
      %316 = vrot.lane.b32.xlu0 %v280, 2
      %v317 = vpop.permute.xlu0 %316
      %320 = vrot.lane.b32.xlu0 %v310, 2
      %v321 = vpop.permute.xlu0 %320
      %vm323 = vcmask 15360
      %v324 = vsel %vm323, %v317, %v321
      %vm325 = vcmask 31744
      %v327 = vsel %vm325, %v311, 0
      %v330 = vsel %vm325, %v312, 0
      %v333 = vsel %vm325, %v313, 0
      %v336 = vsel %vm325, %v314, 0
      %vm338 = vcmask 1043456
      %v340 = vsel %vm338, %v324, 0
      %342 = vmatprep.subr.mxu0 0.0
      %343 = vmatpush1.msra.mxu0 %v340
      %344 = vmatprep.subr.mxu0 0.0
      %345 = vmatpush1.msra.mxu0 0.0
      %346 = vmatprep.subr.mxu0 0.0
      %347 = vmatpush1.msra.mxu0 0.0
      %348 = vmatprep.subr.mxu0 0.0
      %349 = vmatpush1.msra.mxu0 0.0
      %350 = vmatprep.subr.mxu0 0.0
      %351 = vmatpush1.msra.mxu0 0.0
      %352 = vmatprep.subr.mxu0 0.0
      %353 = vmatpush1.msra.mxu0 0.0
      %354 = vmatprep.subr.mxu0 0.0
      %355 = vmatpush1.msra.mxu0 0.0
      %356 = vmatprep.subr.mxu0 0.0
      %357 = vmatpush1.msra.mxu0 0.0
      %358 = vmatprep.subr.mxu0 0.0
      %359 = vmatpush1.msra.mxu0 0.0
      %360 = vmatprep.subr.mxu0 0.0
      %361 = vmatpush1.msra.mxu0 0.0
      %362 = vmatprep.subr.mxu0 0.0
      %363 = vmatpush1.msra.mxu0 0.0
      %364 = vmatprep.subr.mxu0 0.0
      %365 = vmatpush1.msra.mxu0 0.0
      %366 = vmatprep.subr.mxu0 0.0
      %367 = vmatpush1.msra.mxu0 0.0
      %368 = vmatprep.subr.mxu0 0.0
      %369 = vmatpush1.msra.mxu0 0.0
      %370 = vmatprep.subr.mxu0 0.0
      %371 = vmatpush1.msra.mxu0 0.0
      %372 = vmatprep.subr.mxu0 0.0
      %373 = vmatpush1.msra.mxu0 0.0
      %374 = vmatprep.subr.mxu0 0.0
      %375 = vmatpush1.msra.mxu0 0.0
      %376 = vmatprep.subr.mxu0 0.0
      %377 = vmatpush1.msra.mxu0 0.0
      %378 = vmatprep.subr.mxu0 0.0
      %379 = vmatpush1.msra.mxu0 0.0
      %380 = vmatprep.subr.mxu0 0.0
      %381 = vmatpush1.msra.mxu0 0.0
      %382 = vmatprep.subr.mxu0 0.0
      %383 = vmatpush1.msra.mxu0 0.0
      %384 = vmatprep.subr.mxu0 0.0
      %385 = vmatpush1.msra.mxu0 0.0
      %386 = vmatprep.subr.mxu0 0.0
      %387 = vmatpush1.msra.mxu0 0.0
      %388 = vmatprep.subr.mxu0 0.0
      %389 = vmatpush1.msra.mxu0 0.0
      %390 = vmatprep.subr.mxu0 0.0
      %391 = vmatpush1.msra.mxu0 0.0
      %392 = vmatprep.subr.mxu0 0.0
      %393 = vmatpush1.msra.mxu0 0.0
      %394 = vmatprep.subr.mxu0 0.0
      %395 = vmatpush1.msra.mxu0 0.0
      %396 = vmatprep.subr.mxu0 0.0
      %397 = vmatpush1.msra.mxu0 0.0
      %398 = vmatprep.subr.mxu0 0.0
      %399 = vmatpush1.msra.mxu0 0.0
      %400 = vmatprep.subr.mxu0 0.0
      %401 = vmatpush1.msra.mxu0 0.0
      %402 = vmatprep.subr.mxu0 0.0
      %403 = vmatpush1.msra.mxu0 0.0
      %404 = vmatprep.subr.mxu0 0.0
      %405 = vmatpush1.msra.mxu0 0.0
      %406 = vmatprep.mubr.f32.mxu0 0.0
      %407 = vmatmul.mubr.f32.gmra.mrb[0].mxu0 %v327
      %v408 = vpop.f32.mrb[0].mxu0
      %v409 = vadd.f32 0.0, %v408
      %v410 = vpop.f32.mrb[0].mxu0
      %411 = vmatprep.mubr.f32.mxu0 0.0
      %412 = vmatmul.mubr.f32.gmra.mrb[0].mxu0 %v330
      %v413 = vpop.f32.mrb[0].mxu0
      %v414 = vadd.f32 0.0, %v413
      %v415 = vpop.f32.mrb[0].mxu0
      %416 = vmatprep.mubr.f32.mxu0 0.0
      %417 = vmatmul.mubr.f32.gmra.mrb[0].mxu0 %v333
      %v418 = vpop.f32.mrb[0].mxu0
      %v419 = vadd.f32 0.0, %v418
      %v420 = vpop.f32.mrb[0].mxu0
      %421 = vmatprep.mubr.f32.mxu0 0.0
      %422 = vmatmul.mubr.f32.gmra.mrb[0].mxu0 %v336
      %v423 = vpop.f32.mrb[0].mxu0
      %v424 = vadd.f32 0.0, %v423
      %v425 = vpop.f32.mrb[0].mxu0
      %426 = vdwg.mxu0
      %v428 = vsel %vm325, %v306, 0
      %v431 = vsel %vm325, %v307, 0
      %v434 = vsel %vm325, %v308, 0
      %v437 = vsel %vm325, %v309, 0
      %v439 = vsel %vm338, %v310, 0
      %441 = vmatprep.subr.mxu0 0.0
      %442 = vmatpush1.msra.mxu0 %v439
      %443 = vmatprep.subr.mxu0 0.0
      %444 = vmatpush1.msra.mxu0 0.0
      %445 = vmatprep.subr.mxu0 0.0
      %446 = vmatpush1.msra.mxu0 0.0
      %447 = vmatprep.subr.mxu0 0.0
      %448 = vmatpush1.msra.mxu0 0.0
      %449 = vmatprep.subr.mxu0 0.0
      %450 = vmatpush1.msra.mxu0 0.0
      %451 = vmatprep.subr.mxu0 0.0
      %452 = vmatpush1.msra.mxu0 0.0
      %453 = vmatprep.subr.mxu0 0.0
      %454 = vmatpush1.msra.mxu0 0.0
      %455 = vmatprep.subr.mxu0 0.0
      %456 = vmatpush1.msra.mxu0 0.0
      %457 = vmatprep.subr.mxu0 0.0
      %458 = vmatpush1.msra.mxu0 0.0
      %459 = vmatprep.subr.mxu0 0.0
      %460 = vmatpush1.msra.mxu0 0.0
      %461 = vmatprep.subr.mxu0 0.0
      %462 = vmatpush1.msra.mxu0 0.0
      %463 = vmatprep.subr.mxu0 0.0
      %464 = vmatpush1.msra.mxu0 0.0
      %465 = vmatprep.subr.mxu0 0.0
      %466 = vmatpush1.msra.mxu0 0.0
      %467 = vmatprep.subr.mxu0 0.0
      %468 = vmatpush1.msra.mxu0 0.0
      %469 = vmatprep.subr.mxu0 0.0
      %470 = vmatpush1.msra.mxu0 0.0
      %471 = vmatprep.subr.mxu0 0.0
      %472 = vmatpush1.msra.mxu0 0.0
      %473 = vmatprep.subr.mxu0 0.0
      %474 = vmatpush1.msra.mxu0 0.0
      %475 = vmatprep.subr.mxu0 0.0
      %476 = vmatpush1.msra.mxu0 0.0
      %477 = vmatprep.subr.mxu0 0.0
      %478 = vmatpush1.msra.mxu0 0.0
      %479 = vmatprep.subr.mxu0 0.0
      %480 = vmatpush1.msra.mxu0 0.0
      %481 = vmatprep.subr.mxu0 0.0
      %482 = vmatpush1.msra.mxu0 0.0
      %483 = vmatprep.subr.mxu0 0.0
      %484 = vmatpush1.msra.mxu0 0.0
      %485 = vmatprep.subr.mxu0 0.0
      %486 = vmatpush1.msra.mxu0 0.0
      %487 = vmatprep.subr.mxu0 0.0
      %488 = vmatpush1.msra.mxu0 0.0
      %489 = vmatprep.subr.mxu0 0.0
      %490 = vmatpush1.msra.mxu0 0.0
      %491 = vmatprep.subr.mxu0 0.0
      %492 = vmatpush1.msra.mxu0 0.0
      %493 = vmatprep.subr.mxu0 0.0
      %494 = vmatpush1.msra.mxu0 0.0
      %495 = vmatprep.subr.mxu0 0.0
      %496 = vmatpush1.msra.mxu0 0.0
      %497 = vmatprep.subr.mxu0 0.0
      %498 = vmatpush1.msra.mxu0 0.0
      %499 = vmatprep.subr.mxu0 0.0
      %500 = vmatpush1.msra.mxu0 0.0
      %501 = vmatprep.subr.mxu0 0.0
      %502 = vmatpush1.msra.mxu0 0.0
      %503 = vmatprep.subr.mxu0 0.0
      %504 = vmatpush1.msra.mxu0 0.0
      %505 = vmatprep.mubr.f32.mxu0 0.0
      %506 = vmatmul.mubr.f32.gmra.mrb[0].mxu0 %v428
      %v507 = vpop.f32.mrb[0].mxu0
      %v508 = vadd.f32 %v409, %v507
      %v509 = vpop.f32.mrb[0].mxu0
      %510 = vmatprep.mubr.f32.mxu0 0.0
      %511 = vmatmul.mubr.f32.gmra.mrb[0].mxu0 %v431
      %v512 = vpop.f32.mrb[0].mxu0
      %v513 = vadd.f32 %v414, %v512
      %v514 = vpop.f32.mrb[0].mxu0
      %515 = vmatprep.mubr.f32.mxu0 0.0
      %516 = vmatmul.mubr.f32.gmra.mrb[0].mxu0 %v434
      %v517 = vpop.f32.mrb[0].mxu0
      %v518 = vadd.f32 %v419, %v517
      %v519 = vpop.f32.mrb[0].mxu0
      %520 = vmatprep.mubr.f32.mxu0 0.0
      %521 = vmatmul.mubr.f32.gmra.mrb[0].mxu0 %v437
      %v522 = vpop.f32.mrb[0].mxu0
      %v523 = vadd.f32 %v424, %v522
      %v524 = vpop.f32.mrb[0].mxu0
      %525 = vdwg.mxu0
      %s526 = scalar_lea.vmem %s2, 32
      %v527 = vld [vmem:[%s526] sm:$0xff]
      %v528 = vld [vmem:[%s526 + $0x8] sm:$0xff]
      %v529 = vld [vmem:[%s526 + $0x10] sm:$0xff]
      %v530 = vld [vmem:[%s526 + $0x18] sm:$0xff]
      %531 = vrot.lane.b32.xlu0 %v280, 1
      %v532 = vpop.permute.xlu0 %531
      %534 = vrot.lane.b32.xlu0 %v310, 1
      %v535 = vpop.permute.xlu0 %534
      %vm537 = vcmask 7168
      %v538 = vsel %vm537, %v532, %v535
      %v540 = vsel %vm325, %v527, 0
      %v543 = vsel %vm325, %v528, 0
      %v546 = vsel %vm325, %v529, 0
      %v549 = vsel %vm325, %v530, 0
      %v552 = vsel %vm338, %v538, 0
      %554 = vmatprep.subr.mxu0 0.0
      %555 = vmatpush1.msra.mxu0 %v552
      %556 = vmatprep.subr.mxu0 0.0
      %557 = vmatpush1.msra.mxu0 0.0
      %558 = vmatprep.subr.mxu0 0.0
      %559 = vmatpush1.msra.mxu0 0.0
      %560 = vmatprep.subr.mxu0 0.0
      %561 = vmatpush1.msra.mxu0 0.0
      %562 = vmatprep.subr.mxu0 0.0
      %563 = vmatpush1.msra.mxu0 0.0
      %564 = vmatprep.subr.mxu0 0.0
      %565 = vmatpush1.msra.mxu0 0.0
      %566 = vmatprep.subr.mxu0 0.0
      %567 = vmatpush1.msra.mxu0 0.0
      %568 = vmatprep.subr.mxu0 0.0
      %569 = vmatpush1.msra.mxu0 0.0
      %570 = vmatprep.subr.mxu0 0.0
      %571 = vmatpush1.msra.mxu0 0.0
      %572 = vmatprep.subr.mxu0 0.0
      %573 = vmatpush1.msra.mxu0 0.0
      %574 = vmatprep.subr.mxu0 0.0
      %575 = vmatpush1.msra.mxu0 0.0
      %576 = vmatprep.subr.mxu0 0.0
      %577 = vmatpush1.msra.mxu0 0.0
      %578 = vmatprep.subr.mxu0 0.0
      %579 = vmatpush1.msra.mxu0 0.0
      %580 = vmatprep.subr.mxu0 0.0
      %581 = vmatpush1.msra.mxu0 0.0
      %582 = vmatprep.subr.mxu0 0.0
      %583 = vmatpush1.msra.mxu0 0.0
      %584 = vmatprep.subr.mxu0 0.0
      %585 = vmatpush1.msra.mxu0 0.0
      %586 = vmatprep.subr.mxu0 0.0
      %587 = vmatpush1.msra.mxu0 0.0
      %588 = vmatprep.subr.mxu0 0.0
      %589 = vmatpush1.msra.mxu0 0.0
      %590 = vmatprep.subr.mxu0 0.0
      %591 = vmatpush1.msra.mxu0 0.0
      %592 = vmatprep.subr.mxu0 0.0
      %593 = vmatpush1.msra.mxu0 0.0
      %594 = vmatprep.subr.mxu0 0.0
      %595 = vmatpush1.msra.mxu0 0.0
      %596 = vmatprep.subr.mxu0 0.0
      %597 = vmatpush1.msra.mxu0 0.0
      %598 = vmatprep.subr.mxu0 0.0
      %599 = vmatpush1.msra.mxu0 0.0
      %600 = vmatprep.subr.mxu0 0.0
      %601 = vmatpush1.msra.mxu0 0.0
      %602 = vmatprep.subr.mxu0 0.0
      %603 = vmatpush1.msra.mxu0 0.0
      %604 = vmatprep.subr.mxu0 0.0
      %605 = vmatpush1.msra.mxu0 0.0
      %606 = vmatprep.subr.mxu0 0.0
      %607 = vmatpush1.msra.mxu0 0.0
      %608 = vmatprep.subr.mxu0 0.0
      %609 = vmatpush1.msra.mxu0 0.0
      %610 = vmatprep.subr.mxu0 0.0
      %611 = vmatpush1.msra.mxu0 0.0
      %612 = vmatprep.subr.mxu0 0.0
      %613 = vmatpush1.msra.mxu0 0.0
      %614 = vmatprep.subr.mxu0 0.0
      %615 = vmatpush1.msra.mxu0 0.0
      %616 = vmatprep.subr.mxu0 0.0
      %617 = vmatpush1.msra.mxu0 0.0
      %618 = vmatprep.mubr.f32.mxu0 0.0
      %619 = vmatmul.mubr.f32.gmra.mrb[0].mxu0 %v540
      %v620 = vpop.f32.mrb[0].mxu0
      %v621 = vadd.f32 0.0, %v620
      %v622 = vpop.f32.mrb[0].mxu0
      %623 = vmatprep.mubr.f32.mxu0 0.0
      %624 = vmatmul.mubr.f32.gmra.mrb[0].mxu0 %v543
      %v625 = vpop.f32.mrb[0].mxu0
      %v626 = vadd.f32 0.0, %v625
      %v627 = vpop.f32.mrb[0].mxu0
      %628 = vmatprep.mubr.f32.mxu0 0.0
      %629 = vmatmul.mubr.f32.gmra.mrb[0].mxu0 %v546
      %v630 = vpop.f32.mrb[0].mxu0
      %v631 = vadd.f32 0.0, %v630
      %v632 = vpop.f32.mrb[0].mxu0
      %633 = vmatprep.mubr.f32.mxu0 0.0
      %634 = vmatmul.mubr.f32.gmra.mrb[0].mxu0 %v549
      %v635 = vpop.f32.mrb[0].mxu0
      %v636 = vadd.f32 0.0, %v635
      %v637 = vpop.f32.mrb[0].mxu0
      %638 = vdwg.mxu0
      %v639 = vadd.f32 %v508, %v621
      %v640 = vadd.f32 %v513, %v626
      %v641 = vadd.f32 %v518, %v631
      %v642 = vadd.f32 %v523, %v636
      %v643 = vadd.f32 %v639, %v288
      %v644 = vadd.f32 %v640, %v293
      %v645 = vadd.f32 %v641, %v298
      %v646 = vadd.f32 %v642, %v303
      %647 = vst [vmem:[%s274] sm:$0xff] %v643
      %648 = vst [vmem:[%s274 + $0x8] sm:$0xff] %v644
      %649 = vst [vmem:[%s274 + $0x10] sm:$0xff] %v645
      %650 = vst [vmem:[%s274 + $0x18] sm:$0xff] %v646
      %p651 = scmp.lt.s32.totalorder %s19, 1
      %s652 = scalar_select %p651, %s19, 1
      %p653 = scmp.lt.s32.totalorder %s20, 0
      %s654 = scalar_select %p653, %s20, 0
      %s655 = smul.addr %s652, 4
      %s656 = sadd.s32 %s654, %s655
      %s657 = smul.addr %s656, 8
      %s658 = scalar_lea.vmem %s4, %s657
      // Predicated region
      $region37: #{conv1d_forward.1} parent=35 // pred_check
        %p659 = pneg %p151
      $region38: #{conv1d_forward.1} parent=35 // pred_check_branch
        %661 = sbr.rel (%p659) target = $region40
      $region39: #{conv1d_forward.1} parent=35 // pred_region
        _
      $region40: #{conv1d_forward.1} parent=35 // pred_fallthru
        _
    $region36: #{conv1d_forward.1} parent=5 // pred_fallthru
      _
    %p662 = scmp.le.s32.totalorder 2, %s10
    // Predicated region
    $region41: #{conv1d_forward.1} parent=5 // pred_check
      %p663 = pneg %p662
    $region42: #{conv1d_forward.1} parent=5 // pred_check_branch
      %665 = sbr.rel (%p663) target = $region44
    $region43: #{conv1d_forward.1} parent=5 // pred_region
      %s666 = ssub.s32 %s10, 2
      // Predicated region
      $region45: #{conv1d_forward.1} parent=43 // pred_check
        %p667 = pneg %p157
      $region46: #{conv1d_forward.1} parent=43 // pred_check_branch
        %669 = sbr.rel (%p667) target = $region48
      $region47: #{conv1d_forward.1} parent=43 // pred_region
        %p670 = scmp.lt.s32.totalorder %s21, 1
        %s671 = scalar_select %p670, %s21, 1
        %p672 = scmp.lt.s32.totalorder %s22, 0
        %s673 = scalar_select %p672, %s22, 0
        %s674 = smul.addr %s671, 4
        %s675 = sadd.s32 %s673, %s674
        %s676 = smul.addr %s675, 8
        %s677 = scalar_lea.vmem %s4, %s676
      $region48: #{conv1d_forward.1} parent=43 // pred_fallthru
        _
    $region44: #{conv1d_forward.1} parent=5 // pred_fallthru
      _
  $region6: #{conv1d_forward.1} parent=0 // loop_footer
    %s14 = sadd.s32 1, %s10
  $region7: #{conv1d_forward.1} parent=0 // loop_footer_branch
    %9 = sbr.rel target = $region3
  $region8: #{conv1d_forward.1} parent=0 // loop_exit
    _

</llo_original>
